<compile_context>
chip_gen: v7x
topology: tpu7x:2x2x1
jax: 0.10.0
libtpu: 0.0.40
codegen_flags: <defaults>
</compile_context>

<pallas_src>
import functools
import math

import jax
import jax.numpy as jnp
from jax.experimental import pallas as pl
from jax.experimental.pallas import tpu as pltpu


def _attn_kernel(*refs, masked, affine):
    # refs: x, M, Wv_summed, [rowid, colid], [gamma, beta], out
    x_ref, m_ref, wv_ref = refs[0], refs[1], refs[2]
    i = 3
    if masked:
        rowid_ref, colid_ref = refs[i], refs[i + 1]
        i += 2
    if affine:
        gamma_ref, beta_ref = refs[i], refs[i + 1]
        i += 2
    o_ref = refs[i]

    bt, s, d = x_ref.shape          # block of bt batches, full seq, full feature
    rows = bt * s
    cdt = m_ref.dtype               # MXU operand dtype; accumulation is f32

    x = x_ref[...]                  # (bt, S, D) f32 — kept for the residual
    xf = x.reshape(rows, d)         # leading-dim merge only (cheap, last dim kept)
    xc = xf.astype(cdt)

    # scores = (x @ M) @ x^T ; Q/K projections and 1/sqrt(size) folded into M.
    xm = jnp.dot(xc, m_ref[...], preferred_element_type=jnp.float32)      # (R, D)
    scores = jax.lax.dot_general(
        xm.astype(cdt), xc, (((1,), (1,)), ((), ())),
        preferred_element_type=jnp.float32)                               # (R, R)

    if masked:
        # Block-diagonal mask: a row only attends within its own batch.
        same_batch = rowid_ref[...] == colid_ref[...]                     # (R, R)
        scores = jnp.where(same_batch, scores, -1e30)

    # Softmax in f32.  Masked entries give exp(-1e30 - m) == 0 exactly.
    mx = jnp.max(scores, axis=-1, keepdims=True)
    e = jnp.exp(scores - mx)
    p = e * (1.0 / jnp.sum(e, axis=-1, keepdims=True))   # exact reciprocal

    # V projection with the sum-over-heads already folded in, then P @ V.
    v = jnp.dot(xc, wv_ref[...], preferred_element_type=jnp.float32)      # (R, D)
    summed = jnp.dot(p.astype(cdt), v.astype(cdt),
                     preferred_element_type=jnp.float32)                  # (R, D)

    # LayerNorm over features (biased variance, eps=1e-5) + residual, in f32.
    mean = jnp.mean(summed, axis=-1, keepdims=True)
    cen = summed - mean
    var = jnp.mean(cen * cen, axis=-1, keepdims=True)
    normed = cen * jax.lax.rsqrt(var + 1e-5)
    if affine:
        normed = normed * gamma_ref[...] + beta_ref[...]
    o_ref[...] = normed.reshape(bt, s, d) + x


def _cdiv(a, b):
    return -(-a // b)


def _pick_batch_block(B, S, D, *, rows_target=512, vmem_budget=20 * 1024 * 1024):
    """Batches fused per grid step.

    Pick the largest block that (a) gives ~rows_target matmul rows per step
    (fills the 256-wide MXU M dim on v6e/v7x, >=128 on v5e, amortizes the
    ~0.35us/step overhead while keeping the quadratic fused-softmax cost
    bounded), (b) keeps the (R,R) score intermediates + double-buffered blocks
    under a VMEM budget that is safe on v7x (64 MiB physical / 32 MiB scoped),
    and (c) keeps >=2 grid steps for v7x's two TensorCores only when each step
    still has >=256 rows.  No bt | B requirement — the caller pads B.
    """
    align = 8 // math.gcd(S, 8)     # keep bt*S a multiple of 8 (sublane-friendly)

    def vmem_est(bt):
        R = bt * S
        blk = R * D * 4                              # one f32 (bt,S,D) block
        acts = 3 * R * R * 4 + 6 * R * D * 4         # scores/exp/p + xm/v/summed
        return 4 * blk + 4 * D * D * 4 + acts        # 2x dbl-buffered in+out

    bt = max(1, min(B, rows_target // max(S, 1)))
    if bt > 1:
        nsteps = _cdiv(B, bt)
        bt = _cdiv(B, nsteps)                        # even split -> small padding
        if nsteps == 1 and bt * S >= 2 * 256:        # leave work for 2 TCs (v7x)
            bt = _cdiv(bt, 2)
        bt = min(B, _cdiv(bt, align) * align)
    while bt > align and vmem_est(bt) > vmem_budget:
        bt = max(align, (bt // 2) // align * align)
    if bt > 1 and vmem_est(bt) > vmem_budget:
        bt = 1
    # NOTE: if S itself is huge, even bt=1 may not fit and a flash-style S-tiled
    # kernel would be needed; out of scope for the shapes this module implies.
    return bt


def attention_plus_ffn(x, wq, wk, wv, gamma=None, beta=None, *, size, nheads,
                       compute_dtype=jnp.float32):
    """Forward pass of AttentionPlusFFN (== SelfAttention; FFN.forward returns
    its input unchanged).

    x        : (B, S, D) f32, D == size
    wq/wk/wv : (D, D*nheads)  — Linear weights already transposed for x @ W^T
    gamma/beta: optional (D,) LayerNorm affine params; None == identity (default
                LayerNorm init), in which case they are dropped from the kernel.
    """
    B, S, D = x.shape
    assert D == size
    DH = size * nheads
    assert wq.shape == (D, DH) and wk.shape == (D, DH) and wv.shape == (D, DH)

    hi = jax.lax.Precision.HIGHEST
    # Host-side exact algebraic folds (done at full f32 precision):
    #   * Q & K projections and the 1/sqrt(size) softmax scale collapse into one
    #     (D, D) matrix:  q k^T = x (Wq Wk^T / sqrt(size)) x^T.
    #   * the sum over heads of the attention output folds into Wv.
    m_fold = jnp.dot(wq.astype(jnp.float32) * (1.0 / math.sqrt(size)),
                     wk.astype(jnp.float32).T, precision=hi).astype(compute_dtype)
    wv_sum = wv.astype(jnp.float32).reshape(D, nheads, D).sum(axis=1)
    wv_sum = wv_sum.astype(compute_dtype)

    apply_affine = (gamma is not None) or (beta is not None)

    bt = _pick_batch_block(B, S, D)
    nsteps = _cdiv(B, bt)
    B_pad = bt * nsteps
    R = bt * S

    xf = x.astype(jnp.float32)
    if B_pad != B:
        xf = jnp.pad(xf, ((0, B_pad - B), (0, 0), (0, 0)))   # zero rows are inert

    masked = bt > 1
    inputs = [xf, m_fold, wv_sum]
    in_specs = [
        pl.BlockSpec((bt, S, D), lambda i: (i, 0, 0)),    # x block (bt batches)
        pl.BlockSpec((D, D), lambda i: (0, 0)),           # M = (Wq/sqrt(D)) Wk^T
        pl.BlockSpec((D, D), lambda i: (0, 0)),           # head-summed Wv
    ]
    if masked:
        bids = jnp.arange(R, dtype=jnp.int32) // S        # host-built batch ids
        inputs += [bids.reshape(R, 1), bids.reshape(1, R)]
        in_specs += [pl.BlockSpec((R, 1), lambda i: (0, 0)),
                     pl.BlockSpec((1, R), lambda i: (0, 0))]
    if apply_affine:
        g = jnp.ones((D,), jnp.float32) if gamma is None else jnp.asarray(gamma, jnp.float32)
        b = jnp.zeros((D,), jnp.float32) if beta is None else jnp.asarray(beta, jnp.float32)
        inputs += [g.reshape(1, D), b.reshape(1, D)]
        in_specs += [pl.BlockSpec((1, D), lambda i: (0, 0)),
                     pl.BlockSpec((1, D), lambda i: (0, 0))]

    flops = nsteps * (4 * R * D * D + 4 * R * R * D)
    cost = pl.CostEstimate(flops=flops,
                           transcendentals=nsteps * (R * R + 2 * R),
                           bytes_accessed=8 * B_pad * S * D + 8 * D * D)

    out = pl.pallas_call(
        functools.partial(_attn_kernel, masked=masked, affine=apply_affine),
        out_shape=jax.ShapeDtypeStruct((B_pad, S, D), jnp.float32),
        grid_spec=pltpu.PrefetchScalarGridSpec(
            num_scalar_prefetch=0,
            grid=(nsteps,),
            in_specs=in_specs,
            out_specs=pl.BlockSpec((bt, S, D), lambda i: (i, 0, 0)),
        ),
        compiler_params=pltpu.CompilerParams(
            dimension_semantics=("parallel",),
            vmem_limit_bytes=32 * 1024 * 1024),
        cost_estimate=cost,
    )(*inputs)

    return out[:B] if B_pad != B else out


def _reference(x, wq, wk, wv, gamma, beta, *, size, nheads):
    """Pure-JAX faithful port of the PyTorch forward (full-precision f32)."""
    hi = jax.lax.Precision.HIGHEST
    q = jnp.dot(x, wq, precision=hi)
    k = jnp.dot(x, wk, precision=hi)
    v = jnp.dot(x, wv, precision=hi)
    scores = jnp.einsum("bqd,bkd->bqk", q, k, precision=hi) / math.sqrt(size)
    p = jax.nn.softmax(scores, axis=-1)
    attended = jnp.einsum("bqk,bkd->bqd", p, v, precision=hi)
    B, S, _ = x.shape
    summed = attended.reshape(B, S, nheads, size).sum(axis=2)  # sum(torch.split)
    mean = summed.mean(-1, keepdims=True)
    var = ((summed - mean) ** 2).mean(-1, keepdims=True)
    normed = (summed - mean) / jnp.sqrt(var + 1e-5)
    y = normed * gamma + beta + x
    # FFN.forward returns its input unchanged -> AttentionPlusFFN(x) == y
    return y


if __name__ == "__main__":
    # Small synthetic shapes consistent with the module: size=32 features, 4 heads
    B, S, SIZE, NHEADS = 2, 8, 32, 4
    key = jax.random.PRNGKey(0)
    kx, kq, kk, kv, kg, kb = jax.random.split(key, 6)

    x = jax.random.normal(kx, (B, S, SIZE), dtype=jnp.float32)

    # nn.Linear(size, size*nheads, bias=False) weight is (size*nheads, size);
    # output = x @ W^T, so store W^T with shape (size, size*nheads).
    bound = 1.0 / math.sqrt(SIZE)
    wq = jax.random.uniform(kq, (SIZE, SIZE * NHEADS), jnp.float32, -bound, bound)
    wk = jax.random.uniform(kk, (SIZE, SIZE * NHEADS), jnp.float32, -bound, bound)
    wv = jax.random.uniform(kv, (SIZE, SIZE * NHEADS), jnp.float32, -bound, bound)

    # Tolerance covers MXU operand-rounding / reduction-order differences
    # between the in-kernel matmul path and the XLA reference; real bugs give
    # O(1) errors.
    ATOL = RTOL = 2e-3

    # 1) LayerNorm at its default init (gamma=1, beta=0): identity affine is
    #    dropped from the kernel entirely (perf-review item).
    out = attention_plus_ffn(x, wq, wk, wv, size=SIZE, nheads=NHEADS)
    out = jax.block_until_ready(out)
    ref = _reference(x, wq, wk, wv, jnp.ones((SIZE,), jnp.float32),
                     jnp.zeros((SIZE,), jnp.float32), size=SIZE, nheads=NHEADS)
    if out.shape != (B, S, SIZE) or not jnp.allclose(out, ref, atol=ATOL, rtol=RTOL):
        err = float(jnp.max(jnp.abs(out - ref)))
        raise AssertionError(f"identity-affine path mismatch (max err {err:.3e})")

    # 2) General (non-identity) LayerNorm affine path.
    gamma = 1.0 + 0.1 * jax.random.normal(kg, (SIZE,), dtype=jnp.float32)
    beta = 0.1 * jax.random.normal(kb, (SIZE,), dtype=jnp.float32)
    out2 = attention_plus_ffn(x, wq, wk, wv, gamma, beta, size=SIZE, nheads=NHEADS)
    out2 = jax.block_until_ready(out2)
    ref2 = _reference(x, wq, wk, wv, gamma, beta, size=SIZE, nheads=NHEADS)
    if not jnp.allclose(out2, ref2, atol=ATOL, rtol=RTOL):
        err = float(jnp.max(jnp.abs(out2 - ref2)))
        raise AssertionError(f"affine path mismatch (max err {err:.3e})")

    print("KERNEL_OK")
</pallas_src>

<mosaic_0001>
module attributes {stable_mosaic.version = 11 : i64} {
  func.func @_attn_kernel(%arg0: i32, %arg1: memref<2x8x32xf32, #tpu.memory_space<vmem>>, %arg2: memref<32x32xf32, #tpu.memory_space<vmem>>, %arg3: memref<32x32xf32, #tpu.memory_space<vmem>>, %arg4: memref<16x1xi32, #tpu.memory_space<vmem>>, %arg5: memref<1x16xi32, #tpu.memory_space<vmem>>, %arg6: memref<2x8x32xf32, #tpu.memory_space<vmem>>) attributes {dimension_semantics = [#tpu.dimension_semantics<parallel>], iteration_bounds = array<i64: 1>, scalar_prefetch = 0 : i64, scratch_operands = 0 : i64, tpu.core_type = #tpu.core_type<tc>, window_params = [{transform_indices = @transform_0, window_bounds = array<i64: 2, 8, 32>}, {pipeline_mode = #tpu.pipeline_mode<synchronous>, transform_indices = @transform_1, window_bounds = array<i64: 32, 32>}, {pipeline_mode = #tpu.pipeline_mode<synchronous>, transform_indices = @transform_2, window_bounds = array<i64: 32, 32>}, {pipeline_mode = #tpu.pipeline_mode<synchronous>, transform_indices = @transform_3, window_bounds = array<i64: 16, 1>}, {pipeline_mode = #tpu.pipeline_mode<synchronous>, transform_indices = @transform_4, window_bounds = array<i64: 1, 16>}, {transform_indices = @transform_5, window_bounds = array<i64: 2, 8, 32>}]} {
    %c0 = arith.constant 0 : index
    %c0_0 = arith.constant 0 : index
    %c0_1 = arith.constant 0 : index
    %0 = vector.load %arg1[%c0, %c0_0, %c0_1] : memref<2x8x32xf32, #tpu.memory_space<vmem>>, vector<2x8x32xf32>
    %1 = vector.shape_cast %0 : vector<2x8x32xf32> to vector<16x32xf32>
    %c0_2 = arith.constant 0 : index
    %c0_3 = arith.constant 0 : index
    %2 = vector.load %arg2[%c0_2, %c0_3] : memref<32x32xf32, #tpu.memory_space<vmem>>, vector<32x32xf32>
    %cst = arith.constant dense<0.000000e+00> : vector<16x32xf32>
    %3 = tpu.matmul %1, %2, %cst {dimension_numbers = #tpu.dot_dimension_numbers<[1], [0], [0], [1], [0, 0, 1, 1], [], []>} : vector<16x32xf32>, vector<32x32xf32>, vector<16x32xf32> -> vector<16x32xf32>
    %cst_4 = arith.constant dense<0.000000e+00> : vector<16x16xf32>
    %4 = tpu.matmul %3, %1, %cst_4 {dimension_numbers = #tpu.dot_dimension_numbers<[1], [1], [0], [0], [0, 0, 1, 0], [], []>} : vector<16x32xf32>, vector<16x32xf32>, vector<16x16xf32> -> vector<16x16xf32>
    %c0_5 = arith.constant 0 : index
    %c0_6 = arith.constant 0 : index
    %5 = vector.load %arg4[%c0_5, %c0_6] : memref<16x1xi32, #tpu.memory_space<vmem>>, vector<16x1xi32>
    %c0_7 = arith.constant 0 : index
    %c0_8 = arith.constant 0 : index
    %6 = vector.load %arg5[%c0_7, %c0_8] : memref<1x16xi32, #tpu.memory_space<vmem>>, vector<1x16xi32>
    %7 = vector.broadcast %5 : vector<16x1xi32> to vector<16x16xi32>
    %8 = vector.broadcast %6 : vector<1x16xi32> to vector<16x16xi32>
    %9 = arith.cmpi eq, %7, %8 : vector<16x16xi32>
    %cst_9 = arith.constant -1.000000e+30 : f32
    %10 = vector.broadcast %cst_9 : f32 to vector<16x16xf32>
    %11 = arith.select %9, %4, %10 : vector<16x16xi1>, vector<16x16xf32>
    %cst_10 = arith.constant dense<0xFF800000> : vector<16xf32>
    %12 = vector.multi_reduction <maximumf>, %11, %cst_10 [1] : vector<16x16xf32> to vector<16xf32>
    %13 = vector.shape_cast %12 : vector<16xf32> to vector<16x1xf32>
    %14 = vector.broadcast %13 : vector<16x1xf32> to vector<16x16xf32>
    %15 = arith.subf %11, %14 : vector<16x16xf32>
    %16 = math.exp %15 : vector<16x16xf32>
    %cst_11 = arith.constant dense<0.000000e+00> : vector<16xf32>
    %17 = vector.multi_reduction <add>, %16, %cst_11 [1] : vector<16x16xf32> to vector<16xf32>
    %18 = vector.shape_cast %17 : vector<16xf32> to vector<16x1xf32>
    %cst_12 = arith.constant 1.000000e+00 : f32
    %19 = vector.broadcast %cst_12 : f32 to vector<16x1xf32>
    %20 = arith.divf %19, %18 : vector<16x1xf32>
    %21 = vector.broadcast %20 : vector<16x1xf32> to vector<16x16xf32>
    %22 = arith.mulf %16, %21 : vector<16x16xf32>
    %c0_13 = arith.constant 0 : index
    %c0_14 = arith.constant 0 : index
    %23 = vector.load %arg3[%c0_13, %c0_14] : memref<32x32xf32, #tpu.memory_space<vmem>>, vector<32x32xf32>
    %cst_15 = arith.constant dense<0.000000e+00> : vector<16x32xf32>
    %24 = tpu.matmul %1, %23, %cst_15 {dimension_numbers = #tpu.dot_dimension_numbers<[1], [0], [0], [1], [0, 0, 1, 1], [], []>} : vector<16x32xf32>, vector<32x32xf32>, vector<16x32xf32> -> vector<16x32xf32>
    %cst_16 = arith.constant dense<0.000000e+00> : vector<16x32xf32>
    %25 = tpu.matmul %22, %24, %cst_16 {dimension_numbers = #tpu.dot_dimension_numbers<[1], [0], [0], [1], [0, 0, 1, 1], [], []>} : vector<16x16xf32>, vector<16x32xf32>, vector<16x32xf32> -> vector<16x32xf32>
    %cst_17 = arith.constant dense<0.000000e+00> : vector<16xf32>
    %26 = vector.multi_reduction <add>, %25, %cst_17 [1] : vector<16x32xf32> to vector<16xf32>
    %27 = vector.shape_cast %26 : vector<16xf32> to vector<16x1xf32>
    %cst_18 = arith.constant 3.200000e+01 : f32
    %28 = vector.broadcast %cst_18 : f32 to vector<16x1xf32>
    %29 = arith.divf %27, %28 : vector<16x1xf32>
    %30 = vector.broadcast %29 : vector<16x1xf32> to vector<16x32xf32>
    %31 = arith.subf %25, %30 : vector<16x32xf32>
    %32 = arith.mulf %31, %31 : vector<16x32xf32>
    %cst_19 = arith.constant dense<0.000000e+00> : vector<16xf32>
    %33 = vector.multi_reduction <add>, %32, %cst_19 [1] : vector<16x32xf32> to vector<16xf32>
    %34 = vector.shape_cast %33 : vector<16xf32> to vector<16x1xf32>
    %cst_20 = arith.constant 3.200000e+01 : f32
    %35 = vector.broadcast %cst_20 : f32 to vector<16x1xf32>
    %36 = arith.divf %34, %35 : vector<16x1xf32>
    %cst_21 = arith.constant 9.99999974E-6 : f32
    %37 = vector.broadcast %cst_21 : f32 to vector<16x1xf32>
    %38 = arith.addf %36, %37 : vector<16x1xf32>
    %39 = math.rsqrt %38 : vector<16x1xf32>
    %40 = vector.broadcast %39 : vector<16x1xf32> to vector<16x32xf32>
    %41 = arith.mulf %31, %40 : vector<16x32xf32>
    %42 = vector.shape_cast %41 : vector<16x32xf32> to vector<2x8x32xf32>
    %43 = arith.addf %42, %0 : vector<2x8x32xf32>
    %c0_22 = arith.constant 0 : index
    %c0_23 = arith.constant 0 : index
    %c0_24 = arith.constant 0 : index
    %44 = vector.load %arg6[%c0_22, %c0_23, %c0_24] : memref<2x8x32xf32, #tpu.memory_space<vmem>>, vector<2x8x32xf32>
    tpu.vector_store %arg6[%c0_22, %c0_23, %c0_24], %43 {strides = array<i32>} : memref<2x8x32xf32, #tpu.memory_space<vmem>>, vector<2x8x32xf32>,
    return
  }
  func.func @transform_0(%arg0: i32) -> (i32, i32, i32) {
    %c0_i32 = arith.constant 0 : i32
    %c0_i32_0 = arith.constant 0 : i32
    %c0_i32_1 = arith.constant 0 : i32
    return %arg0, %c0_i32, %c0_i32_0 : i32, i32, i32
  }
  func.func @transform_1(%arg0: i32) -> (i32, i32) {
    %c0_i32 = arith.constant 0 : i32
    %c0_i32_0 = arith.constant 0 : i32
    %c0_i32_1 = arith.constant 0 : i32
    return %c0_i32, %c0_i32_0 : i32, i32
  }
  func.func @transform_2(%arg0: i32) -> (i32, i32) {
    %c0_i32 = arith.constant 0 : i32
    %c0_i32_0 = arith.constant 0 : i32
    %c0_i32_1 = arith.constant 0 : i32
    return %c0_i32, %c0_i32_0 : i32, i32
  }
  func.func @transform_3(%arg0: i32) -> (i32, i32) {
    %c0_i32 = arith.constant 0 : i32
    %c0_i32_0 = arith.constant 0 : i32
    %c0_i32_1 = arith.constant 0 : i32
    return %c0_i32, %c0_i32_0 : i32, i32
  }
  func.func @transform_4(%arg0: i32) -> (i32, i32) {
    %c0_i32 = arith.constant 0 : i32
    %c0_i32_0 = arith.constant 0 : i32
    %c0_i32_1 = arith.constant 0 : i32
    return %c0_i32, %c0_i32_0 : i32, i32
  }
  func.func @transform_5(%arg0: i32) -> (i32, i32, i32) {
    %c0_i32 = arith.constant 0 : i32
    %c0_i32_0 = arith.constant 0 : i32
    %c0_i32_1 = arith.constant 0 : i32
    return %arg0, %c0_i32, %c0_i32_0 : i32, i32, i32
  }
}

</mosaic_0001>

<llo_original>
// kernel: tpu_custom_call.1
$region0: #{tpu_custom_call.1}
  #allocation0 [shape = 'u32[]', space=smem, size = 0x4, offset = 0x4, fixed_abs, tag = 'smem constant byte address 0x4 - core index']
  #allocation1 [shape = 'u32[144,128]{1,0:T(1,128)}', space=vmem, size = 0x12000, scoped, tag = 'internal scratch']
  %s0 = inlined_call_operand.vmem [shape: f32[2,8,32], index: 0, kind: input, shape index: {}]
  %s1 = inlined_call_operand.hbm [shape: f32[32,32], index: 1, kind: input, shape index: {}]
  %s2 = inlined_call_operand.hbm [shape: f32[32,32], index: 2, kind: input, shape index: {}]
  %s3 = inlined_call_operand.vmem [shape: s32[16,1], index: 3, kind: input, shape index: {}]
  %s4 = inlined_call_operand.vmem [shape: s32[1,16], index: 4, kind: input, shape index: {}]
  %s5 = inlined_call_operand.hbm [shape: f32[2,8,32], index: 5, kind: output, shape index: {}]
  %s6 = sld [smem:[#allocation0]]
  $region38: #{tpu_custom_call.1} parent=0
    _
  %s8 = ssub.s32 1, %s6
  %s9 = scalar_select 0, %s8, %s6
  $region1: #{tpu_custom_call.1} parent=0
    #allocation2 [shape = 'u8[16384]{0}', space=vmem, size = 0x4000, scoped, tag = 'input window, operand 1, single buffered']
    #allocation3 [shape = 's32[1]{0}', space=sflag, size = 0x4, scoped, tag = 'scoped memory for tpu_custom_call.1']
    #allocation4 [shape = 's32[1]{0}', space=sflag, size = 0x4, scoped, tag = 'scoped memory for tpu_custom_call.1']
    #allocation5 [shape = 'u8[16384]{0}', space=vmem, size = 0x4000, scoped, tag = 'input window, operand 2, single buffered']
    #allocation6 [shape = 's32[1]{0}', space=sflag, size = 0x4, scoped, tag = 'scoped memory for tpu_custom_call.1']
    #allocation7 [shape = 'u8[8192]{0}', space=vmem, size = 0x2000, scoped, tag = 'output window, operand 0, single buffered']
    %10 = vsyncpa [#allocation3], 0
    %11 = vsyncpa [#allocation6], 0
    %12 = vsyncpa [#allocation4], 0
    // Predicated region
    $region2: #{tpu_custom_call.1} parent=1 // pred_check
      _
    $region3: #{tpu_custom_call.1} parent=1 // pred_check_branch
      %14 = sbr.rel (0) target = $region5
    $region4: #{tpu_custom_call.1} parent=1 // pred_region
      _
    $region5: #{tpu_custom_call.1} parent=1 // pred_fallthru
      _
    // Predicated region
    $region6: #{tpu_custom_call.1} parent=1 // pred_check
      _
    $region7: #{tpu_custom_call.1} parent=1 // pred_check_branch
      %16 = sbr.rel (0) target = $region9
    $region8: #{tpu_custom_call.1} parent=1 // pred_region
      %s18 = ssub.s32 512, 512
      %19 = vsyncadd [#allocation3], %s18
      %s20 = sshll.u32 [#allocation2], 4
      %s21 = int_to_ptr.vmem [resolvable:$true] %s20
      %26 = dma.hbm_to_vmem [thread:$0]  %s1, 512, %s21, [#allocation3], 128, 128, 8
    $region9: #{tpu_custom_call.1} parent=1 // pred_fallthru
      _
    // Predicated region
    $region10: #{tpu_custom_call.1} parent=1 // pred_check
      _
    $region11: #{tpu_custom_call.1} parent=1 // pred_check_branch
      %28 = sbr.rel (0) target = $region13
    $region12: #{tpu_custom_call.1} parent=1 // pred_region
      %s30 = ssub.s32 512, 512
      %31 = vsyncadd [#allocation6], %s30
      %s32 = sshll.u32 [#allocation5], 4
      %s33 = int_to_ptr.vmem [resolvable:$true] %s32
      %38 = dma.hbm_to_vmem [thread:$0]  %s2, 512, %s33, [#allocation6], 128, 128, 8
    $region13: #{tpu_custom_call.1} parent=1 // pred_fallthru
      _
    // Predicated region
    $region14: #{tpu_custom_call.1} parent=1 // pred_check
      _
    $region15: #{tpu_custom_call.1} parent=1 // pred_check_branch
      %40 = sbr.rel (0) target = $region17
    $region16: #{tpu_custom_call.1} parent=1 // pred_region
      _
    $region17: #{tpu_custom_call.1} parent=1 // pred_fallthru
      _
    // Predicated region
    $region18: #{tpu_custom_call.1} parent=1 // pred_check
      _
    $region19: #{tpu_custom_call.1} parent=1 // pred_check_branch
      %42 = sbr.rel (0) target = $region21
    $region20: #{tpu_custom_call.1} parent=1 // pred_region
      _
    $region21: #{tpu_custom_call.1} parent=1 // pred_fallthru
      _
    // Predicated region
    $region22: #{tpu_custom_call.1} parent=1 // pred_check
      _
    $region23: #{tpu_custom_call.1} parent=1 // pred_check_branch
      %44 = sbr.rel (0) target = $region25
    $region24: #{tpu_custom_call.1} parent=1 // pred_region
      %45 = dma.done [#allocation3], 512
    $region25: #{tpu_custom_call.1} parent=1 // pred_fallthru
      _
    // Predicated region
    $region26: #{tpu_custom_call.1} parent=1 // pred_check
      _
    $region27: #{tpu_custom_call.1} parent=1 // pred_check_branch
      %47 = sbr.rel (0) target = $region29
    $region28: #{tpu_custom_call.1} parent=1 // pred_region
      %48 = dma.done [#allocation6], 512
    $region29: #{tpu_custom_call.1} parent=1 // pred_fallthru
      _
    %v49 = vld [vmem:[%s0] sm:$0xff]
    %v50 = vld [vmem:[%s0 + $0x8] sm:$0xff]
    %v51 = vld [vmem:[#allocation2] sm:$0xff]
    %v52 = vld [vmem:[#allocation2 + $0x8] sm:$0xff]
    %v53 = vld [vmem:[#allocation2 + $0x10] sm:$0xff]
    %v54 = vld [vmem:[#allocation2 + $0x18] sm:$0xff]
    %vm55 = vcmask 261120
    %v57 = vsel %vm55, %v49, 0
    %v60 = vsel %vm55, %v50, 0
    %62 = vmatprep.subr.mxu0 0.0
    %63 = vmatpush1.msra.mxu0 %v51
    %64 = vmatprep.subr.mxu0 0.0
    %65 = vmatpush1.msra.mxu0 %v52
    %66 = vmatprep.subr.mxu0 0.0
    %67 = vmatpush1.msra.mxu0 %v53
    %68 = vmatprep.subr.mxu0 0.0
    %69 = vmatpush1.msra.mxu0 %v54
    %70 = vmatprep.subr.mxu0 0.0
    %71 = vmatpush1.msra.mxu0 0.0
    %72 = vmatprep.subr.mxu0 0.0
    %73 = vmatpush1.msra.mxu0 0.0
    %74 = vmatprep.subr.mxu0 0.0
    %75 = vmatpush1.msra.mxu0 0.0
    %76 = vmatprep.subr.mxu0 0.0
    %77 = vmatpush1.msra.mxu0 0.0
    %78 = vmatprep.subr.mxu0 0.0
    %79 = vmatpush1.msra.mxu0 0.0
    %80 = vmatprep.subr.mxu0 0.0
    %81 = vmatpush1.msra.mxu0 0.0
    %82 = vmatprep.subr.mxu0 0.0
    %83 = vmatpush1.msra.mxu0 0.0
    %84 = vmatprep.subr.mxu0 0.0
    %85 = vmatpush1.msra.mxu0 0.0
    %86 = vmatprep.subr.mxu0 0.0
    %87 = vmatpush1.msra.mxu0 0.0
    %88 = vmatprep.subr.mxu0 0.0
    %89 = vmatpush1.msra.mxu0 0.0
    %90 = vmatprep.subr.mxu0 0.0
    %91 = vmatpush1.msra.mxu0 0.0
    %92 = vmatprep.subr.mxu0 0.0
    %93 = vmatpush1.msra.mxu0 0.0
    %94 = vmatprep.subr.mxu0 0.0
    %95 = vmatpush1.msra.mxu0 0.0
    %96 = vmatprep.subr.mxu0 0.0
    %97 = vmatpush1.msra.mxu0 0.0
    %98 = vmatprep.subr.mxu0 0.0
    %99 = vmatpush1.msra.mxu0 0.0
    %100 = vmatprep.subr.mxu0 0.0
    %101 = vmatpush1.msra.mxu0 0.0
    %102 = vmatprep.subr.mxu0 0.0
    %103 = vmatpush1.msra.mxu0 0.0
    %104 = vmatprep.subr.mxu0 0.0
    %105 = vmatpush1.msra.mxu0 0.0
    %106 = vmatprep.subr.mxu0 0.0
    %107 = vmatpush1.msra.mxu0 0.0
    %108 = vmatprep.subr.mxu0 0.0
    %109 = vmatpush1.msra.mxu0 0.0
    %110 = vmatprep.subr.mxu0 0.0
    %111 = vmatpush1.msra.mxu0 0.0
    %112 = vmatprep.subr.mxu0 0.0
    %113 = vmatpush1.msra.mxu0 0.0
    %114 = vmatprep.subr.mxu0 0.0
    %115 = vmatpush1.msra.mxu0 0.0
    %116 = vmatprep.subr.mxu0 0.0
    %117 = vmatpush1.msra.mxu0 0.0
    %118 = vmatprep.subr.mxu0 0.0
    %119 = vmatpush1.msra.mxu0 0.0
    %120 = vmatprep.subr.mxu0 0.0
    %121 = vmatpush1.msra.mxu0 0.0
    %122 = vmatprep.subr.mxu0 0.0
    %123 = vmatpush1.msra.mxu0 0.0
    %124 = vmatprep.subr.mxu0 0.0
    %125 = vmatpush1.msra.mxu0 0.0
    %126 = vmatprep.mubr.f32.mxu0 0.0
    %127 = vmatmul.mubr.f32.gmra.mrb[0].mxu0 %v57
    %v128 = vpop.f32.mrb[0].mxu0
    %v129 = vadd.f32 0.0, %v128
    %v130 = vpop.f32.mrb[0].mxu0
    %131 = vmatprep.mubr.f32.mxu0 0.0
    %132 = vmatmul.mubr.f32.gmra.mrb[0].mxu0 %v60
    %v133 = vpop.f32.mrb[0].mxu0
    %v134 = vadd.f32 0.0, %v133
    %v135 = vpop.f32.mrb[0].mxu0
    %136 = vdwg.mxu0
    %v138 = vsel %vm55, %v129, 0
    %v141 = vsel %vm55, %v134, 0
    %143 = vmatprep.subr.mxu0 0.0
    %144 = vmatpush1.xpose.msra.mxu0 %v57
    %145 = vmatprep.subr.mxu0 0.0
    %146 = vmatpush1.xpose.msra.mxu0 %v60
    %147 = vmatprep.subr.mxu0 0.0
    %148 = vmatpush1.xpose.msra.mxu0 0.0
    %149 = vmatprep.subr.mxu0 0.0
    %150 = vmatpush1.xpose.msra.mxu0 0.0
    %151 = vmatprep.subr.mxu0 0.0
    %152 = vmatpush1.xpose.msra.mxu0 0.0
    %153 = vmatprep.subr.mxu0 0.0
    %154 = vmatpush1.xpose.msra.mxu0 0.0
    %155 = vmatprep.subr.mxu0 0.0
    %156 = vmatpush1.xpose.msra.mxu0 0.0
    %157 = vmatprep.subr.mxu0 0.0
    %158 = vmatpush1.xpose.msra.mxu0 0.0
    %159 = vmatprep.subr.mxu0 0.0
    %160 = vmatpush1.xpose.msra.mxu0 0.0
    %161 = vmatprep.subr.mxu0 0.0
    %162 = vmatpush1.xpose.msra.mxu0 0.0
    %163 = vmatprep.subr.mxu0 0.0
    %164 = vmatpush1.xpose.msra.mxu0 0.0
    %165 = vmatprep.subr.mxu0 0.0
    %166 = vmatpush1.xpose.msra.mxu0 0.0
    %167 = vmatprep.subr.mxu0 0.0
    %168 = vmatpush1.xpose.msra.mxu0 0.0
    %169 = vmatprep.subr.mxu0 0.0
    %170 = vmatpush1.xpose.msra.mxu0 0.0
    %171 = vmatprep.subr.mxu0 0.0
    %172 = vmatpush1.xpose.msra.mxu0 0.0
    %173 = vmatprep.subr.mxu0 0.0
    %174 = vmatpush1.xpose.msra.mxu0 0.0
    %175 = vmatprep.subr.mxu0 0.0
    %176 = vmatpush1.xpose.msra.mxu0 0.0
    %177 = vmatprep.subr.mxu0 0.0
    %178 = vmatpush1.xpose.msra.mxu0 0.0
    %179 = vmatprep.subr.mxu0 0.0
    %180 = vmatpush1.xpose.msra.mxu0 0.0
    %181 = vmatprep.subr.mxu0 0.0
    %182 = vmatpush1.xpose.msra.mxu0 0.0
    %183 = vmatprep.subr.mxu0 0.0
    %184 = vmatpush1.xpose.msra.mxu0 0.0
    %185 = vmatprep.subr.mxu0 0.0
    %186 = vmatpush1.xpose.msra.mxu0 0.0
    %187 = vmatprep.subr.mxu0 0.0
    %188 = vmatpush1.xpose.msra.mxu0 0.0
    %189 = vmatprep.subr.mxu0 0.0
    %190 = vmatpush1.xpose.msra.mxu0 0.0
    %191 = vmatprep.subr.mxu0 0.0
    %192 = vmatpush1.xpose.msra.mxu0 0.0
    %193 = vmatprep.subr.mxu0 0.0
    %194 = vmatpush1.xpose.msra.mxu0 0.0
    %195 = vmatprep.subr.mxu0 0.0
    %196 = vmatpush1.xpose.msra.mxu0 0.0
    %197 = vmatprep.subr.mxu0 0.0
    %198 = vmatpush1.xpose.msra.mxu0 0.0
    %199 = vmatprep.subr.mxu0 0.0
    %200 = vmatpush1.xpose.msra.mxu0 0.0
    %201 = vmatprep.subr.mxu0 0.0
    %202 = vmatpush1.xpose.msra.mxu0 0.0
    %203 = vmatprep.subr.mxu0 0.0
    %204 = vmatpush1.xpose.msra.mxu0 0.0
    %205 = vmatprep.subr.mxu0 0.0
    %206 = vmatpush1.xpose.msra.mxu0 0.0
    %207 = vmatprep.mubr.f32.mxu0 0.0
    %208 = vmatmul.mubr.f32.gmra.mrb[0].mxu0 %v138
    %v209 = vpop.f32.mrb[0].mxu0
    %v210 = vadd.f32 0.0, %v209
    %v211 = vpop.f32.mrb[0].mxu0
    %212 = vmatprep.mubr.f32.mxu0 0.0
    %213 = vmatmul.mubr.f32.gmra.mrb[0].mxu0 %v141
    %v214 = vpop.f32.mrb[0].mxu0
    %v215 = vadd.f32 0.0, %v214
    %v216 = vpop.f32.mrb[0].mxu0
    %217 = vdwg.mxu0
    %v218 = vld [vmem:[%s3] sm:$0xff]
    %v219 = vld [vmem:[%s3 + $0x8] sm:$0xff]
    %v220 = vld [vmem:[%s4] sm:$0x1]
    %221 = vset.pattern.permute.xlu0 0
    %222 = vperm.xlu0 %221, %v218
    %v223 = vpop.permute.xlu0 %222
    %224 = vset.pattern.permute.xlu0 0
    %225 = vperm.xlu0 %224, %v219
    %v226 = vpop.permute.xlu0 %225
    %v227 = vlaneseq
    %v228 = vshrl.u32 %v227, 7
    %v229 = vsub.s32 0, %v228
    %v230 = vrot.slane %v220, %v229
    %vm231 = vcmp.eq.s32.totalorder %v223, %v230
    %vm232 = vcmp.eq.s32.totalorder %v226, %v230
    %v233 = vsel %vm231, %v210, -1e+30
    %v234 = vsel %vm232, %v215, -1e+30
    %vm235 = vcmask 130048
    %v236 = vsel %vm235, %v233, -inf
    %237 = vmax.xlane.f32.xlu0 %v236
    %v238 = vpop.xlane.xlu0 %237
    %v239 = vsel %vm235, %v234, -inf
    %240 = vmax.xlane.f32.xlu0 %v239
    %v241 = vpop.xlane.xlu0 %240
    %v242 = vsub.f32 %v233, %v238
    %v243 = vsub.f32 %v234, %v241
    %v244 = vmul.f32 %v242, 1.442695
    %v245 = vpow.pop %v244
    %v246 = vmul.f32 %v243, 1.442695
    %v247 = vpow.pop %v246
    %v248 = vsel %vm235, %v245, 0.0
    %249 = vadd.xlane.f32.xlu0 %v248
    %v250 = vpop.xlane.xlu0 %249
    %v251 = vsel %vm235, %v247, 0.0
    %252 = vadd.xlane.f32.xlu0 %v251
    %v253 = vpop.xlane.xlu0 %252
    %v254 = vrcp.pop %v250
    %v255 = vmul.f32 1.0, %v254
    %v256 = vrcp.pop %v253
    %v257 = vmul.f32 1.0, %v256
    %v258 = vmul.f32 %v245, %v255
    %v259 = vmul.f32 %v247, %v257
    %v260 = vld [vmem:[#allocation5] sm:$0xff]
    %v261 = vld [vmem:[#allocation5 + $0x8] sm:$0xff]
    %v262 = vld [vmem:[#allocation5 + $0x10] sm:$0xff]
    %v263 = vld [vmem:[#allocation5 + $0x18] sm:$0xff]
    %264 = vmatprep.subr.mxu0 0.0
    %265 = vmatpush1.msra.mxu0 %v260
    %266 = vmatprep.subr.mxu0 0.0
    %267 = vmatpush1.msra.mxu0 %v261
    %268 = vmatprep.subr.mxu0 0.0
    %269 = vmatpush1.msra.mxu0 %v262
    %270 = vmatprep.subr.mxu0 0.0
    %271 = vmatpush1.msra.mxu0 %v263
    %272 = vmatprep.subr.mxu0 0.0
    %273 = vmatpush1.msra.mxu0 0.0
    %274 = vmatprep.subr.mxu0 0.0
    %275 = vmatpush1.msra.mxu0 0.0
    %276 = vmatprep.subr.mxu0 0.0
    %277 = vmatpush1.msra.mxu0 0.0
    %278 = vmatprep.subr.mxu0 0.0
    %279 = vmatpush1.msra.mxu0 0.0
    %280 = vmatprep.subr.mxu0 0.0
    %281 = vmatpush1.msra.mxu0 0.0
    %282 = vmatprep.subr.mxu0 0.0
    %283 = vmatpush1.msra.mxu0 0.0
    %284 = vmatprep.subr.mxu0 0.0
    %285 = vmatpush1.msra.mxu0 0.0
    %286 = vmatprep.subr.mxu0 0.0
    %287 = vmatpush1.msra.mxu0 0.0
    %288 = vmatprep.subr.mxu0 0.0
    %289 = vmatpush1.msra.mxu0 0.0
    %290 = vmatprep.subr.mxu0 0.0
    %291 = vmatpush1.msra.mxu0 0.0
    %292 = vmatprep.subr.mxu0 0.0
    %293 = vmatpush1.msra.mxu0 0.0
    %294 = vmatprep.subr.mxu0 0.0
    %295 = vmatpush1.msra.mxu0 0.0
    %296 = vmatprep.subr.mxu0 0.0
    %297 = vmatpush1.msra.mxu0 0.0
    %298 = vmatprep.subr.mxu0 0.0
    %299 = vmatpush1.msra.mxu0 0.0
    %300 = vmatprep.subr.mxu0 0.0
    %301 = vmatpush1.msra.mxu0 0.0
    %302 = vmatprep.subr.mxu0 0.0
    %303 = vmatpush1.msra.mxu0 0.0
    %304 = vmatprep.subr.mxu0 0.0
    %305 = vmatpush1.msra.mxu0 0.0
    %306 = vmatprep.subr.mxu0 0.0
    %307 = vmatpush1.msra.mxu0 0.0
    %308 = vmatprep.subr.mxu0 0.0
    %309 = vmatpush1.msra.mxu0 0.0
    %310 = vmatprep.subr.mxu0 0.0
    %311 = vmatpush1.msra.mxu0 0.0
    %312 = vmatprep.subr.mxu0 0.0
    %313 = vmatpush1.msra.mxu0 0.0
    %314 = vmatprep.subr.mxu0 0.0
    %315 = vmatpush1.msra.mxu0 0.0
    %316 = vmatprep.subr.mxu0 0.0
    %317 = vmatpush1.msra.mxu0 0.0
    %318 = vmatprep.subr.mxu0 0.0
    %319 = vmatpush1.msra.mxu0 0.0
    %320 = vmatprep.subr.mxu0 0.0
    %321 = vmatpush1.msra.mxu0 0.0
    %322 = vmatprep.subr.mxu0 0.0
    %323 = vmatpush1.msra.mxu0 0.0
    %324 = vmatprep.subr.mxu0 0.0
    %325 = vmatpush1.msra.mxu0 0.0
    %326 = vmatprep.subr.mxu0 0.0
    %327 = vmatpush1.msra.mxu0 0.0
    %328 = vmatprep.mubr.f32.mxu0 0.0
    %329 = vmatmul.mubr.f32.gmra.mrb[0].mxu0 %v57
    %v330 = vpop.f32.mrb[0].mxu0
    %v331 = vadd.f32 0.0, %v330
    %v332 = vpop.f32.mrb[0].mxu0
    %333 = vmatprep.mubr.f32.mxu0 0.0
    %334 = vmatmul.mubr.f32.gmra.mrb[0].mxu0 %v60
    %v335 = vpop.f32.mrb[0].mxu0
    %v336 = vadd.f32 0.0, %v335
    %v337 = vpop.f32.mrb[0].mxu0
    %338 = vdwg.mxu0
    %v340 = vsel %vm235, %v258, 0
    %v343 = vsel %vm235, %v259, 0
    %345 = vmatprep.subr.mxu0 0.0
    %346 = vmatpush1.msra.mxu0 %v331
    %347 = vmatprep.subr.mxu0 0.0
    %348 = vmatpush1.msra.mxu0 %v336
    %349 = vmatprep.subr.mxu0 0.0
    %350 = vmatpush1.msra.mxu0 0.0
    %351 = vmatprep.subr.mxu0 0.0
    %352 = vmatpush1.msra.mxu0 0.0
    %353 = vmatprep.subr.mxu0 0.0
    %354 = vmatpush1.msra.mxu0 0.0
    %355 = vmatprep.subr.mxu0 0.0
    %356 = vmatpush1.msra.mxu0 0.0
    %357 = vmatprep.subr.mxu0 0.0
    %358 = vmatpush1.msra.mxu0 0.0
    %359 = vmatprep.subr.mxu0 0.0
    %360 = vmatpush1.msra.mxu0 0.0
    %361 = vmatprep.subr.mxu0 0.0
    %362 = vmatpush1.msra.mxu0 0.0
    %363 = vmatprep.subr.mxu0 0.0
    %364 = vmatpush1.msra.mxu0 0.0
    %365 = vmatprep.subr.mxu0 0.0
    %366 = vmatpush1.msra.mxu0 0.0
    %367 = vmatprep.subr.mxu0 0.0
    %368 = vmatpush1.msra.mxu0 0.0
    %369 = vmatprep.subr.mxu0 0.0
    %370 = vmatpush1.msra.mxu0 0.0
    %371 = vmatprep.subr.mxu0 0.0
    %372 = vmatpush1.msra.mxu0 0.0
    %373 = vmatprep.subr.mxu0 0.0
    %374 = vmatpush1.msra.mxu0 0.0
    %375 = vmatprep.subr.mxu0 0.0
    %376 = vmatpush1.msra.mxu0 0.0
    %377 = vmatprep.subr.mxu0 0.0
    %378 = vmatpush1.msra.mxu0 0.0
    %379 = vmatprep.subr.mxu0 0.0
    %380 = vmatpush1.msra.mxu0 0.0
    %381 = vmatprep.subr.mxu0 0.0
    %382 = vmatpush1.msra.mxu0 0.0
    %383 = vmatprep.subr.mxu0 0.0
    %384 = vmatpush1.msra.mxu0 0.0
    %385 = vmatprep.subr.mxu0 0.0
    %386 = vmatpush1.msra.mxu0 0.0
    %387 = vmatprep.subr.mxu0 0.0
    %388 = vmatpush1.msra.mxu0 0.0
    %389 = vmatprep.subr.mxu0 0.0
    %390 = vmatpush1.msra.mxu0 0.0
    %391 = vmatprep.subr.mxu0 0.0
    %392 = vmatpush1.msra.mxu0 0.0
    %393 = vmatprep.subr.mxu0 0.0
    %394 = vmatpush1.msra.mxu0 0.0
    %395 = vmatprep.subr.mxu0 0.0
    %396 = vmatpush1.msra.mxu0 0.0
    %397 = vmatprep.subr.mxu0 0.0
    %398 = vmatpush1.msra.mxu0 0.0
    %399 = vmatprep.subr.mxu0 0.0
    %400 = vmatpush1.msra.mxu0 0.0
    %401 = vmatprep.subr.mxu0 0.0
    %402 = vmatpush1.msra.mxu0 0.0
    %403 = vmatprep.subr.mxu0 0.0
    %404 = vmatpush1.msra.mxu0 0.0
    %405 = vmatprep.subr.mxu0 0.0
    %406 = vmatpush1.msra.mxu0 0.0
    %407 = vmatprep.subr.mxu0 0.0
    %408 = vmatpush1.msra.mxu0 0.0
    %409 = vmatprep.mubr.f32.mxu0 0.0
    %410 = vmatmul.mubr.f32.gmra.mrb[0].mxu0 %v340
    %v411 = vpop.f32.mrb[0].mxu0
    %v412 = vadd.f32 0.0, %v411
    %v413 = vpop.f32.mrb[0].mxu0
    %414 = vmatprep.mubr.f32.mxu0 0.0
    %415 = vmatmul.mubr.f32.gmra.mrb[0].mxu0 %v343
    %v416 = vpop.f32.mrb[0].mxu0
    %v417 = vadd.f32 0.0, %v416
    %v418 = vpop.f32.mrb[0].mxu0
    %419 = vdwg.mxu0
    %v420 = vsel %vm55, %v412, 0.0
    %421 = vadd.xlane.f32.xlu0 %v420
    %v422 = vpop.xlane.xlu0 %421
    %v423 = vsel %vm55, %v417, 0.0
    %424 = vadd.xlane.f32.xlu0 %v423
    %v425 = vpop.xlane.xlu0 %424
    %v426 = vrcp.pop 32.0
    %v427 = vmul.f32 %v422, %v426
    %v428 = vmul.f32 %v425, %v426
    %v429 = vsub.f32 %v412, %v427
    %v430 = vsub.f32 %v417, %v428
    %v431 = vmul.f32 %v429, %v429
    %v432 = vmul.f32 %v430, %v430
    %v433 = vsel %vm55, %v431, 0.0
    %434 = vadd.xlane.f32.xlu0 %v433
    %v435 = vpop.xlane.xlu0 %434
    %v436 = vsel %vm55, %v432, 0.0
    %437 = vadd.xlane.f32.xlu0 %v436
    %v438 = vpop.xlane.xlu0 %437
    %v439 = vmul.f32 %v435, %v426
    %v440 = vmul.f32 %v438, %v426
    %v441 = vadd.f32 %v439, 1e-05
    %v442 = vadd.f32 %v440, 1e-05
    %v443 = vrsqrt.pop %v441
    %v444 = vrsqrt.pop %v442
    %v445 = vmul.f32 %v429, %v443
    %v446 = vmul.f32 %v430, %v444
    %v447 = vadd.f32 %v445, %v49
    %v448 = vadd.f32 %v446, %v50
    %449 = vst.msk [vmem:[#allocation7] sm:$0xff] %vm55, %v447
    %450 = vst.msk [vmem:[#allocation7 + $0x8] sm:$0xff] %vm55, %v448
    // Predicated region
    $region30: #{tpu_custom_call.1} parent=1 // pred_check
      _
    $region31: #{tpu_custom_call.1} parent=1 // pred_check_branch
      %452 = sbr.rel (0) target = $region33
    $region32: #{tpu_custom_call.1} parent=1 // pred_region
      %s454 = ssub.s32 256, 256
      %455 = vsyncadd [#allocation4], %s454
      %s456 = sshll.u32 [#allocation7], 4
      %s457 = int_to_ptr.vmem [resolvable:$true] %s456
      %462 = dma.vmem_to_hbm [thread:$0]  %s457, 256, %s5, [#allocation4], 128, 128, 8
    $region33: #{tpu_custom_call.1} parent=1 // pred_fallthru
      _
    // Predicated region
    $region34: #{tpu_custom_call.1} parent=1 // pred_check
      _
    $region35: #{tpu_custom_call.1} parent=1 // pred_check_branch
      %464 = sbr.rel (0) target = $region37
    $region36: #{tpu_custom_call.1} parent=1 // pred_region
      %465 = dma.done [#allocation4], 256
    $region37: #{tpu_custom_call.1} parent=1 // pred_fallthru
      _
    %466 = vsyncpa [#allocation3], 1
    %467 = vsyncpa [#allocation6], 1
    %468 = vsyncpa [#allocation4], 1

</llo_original>
